<compile_context>
chip_gen: v7x
topology: tpu7x:2x2x1
jax: 0.10.0
libtpu: 0.0.40
codegen_flags: <defaults>
</compile_context>

<pallas_src>
import math

import jax
import jax.numpy as jnp
from jax.experimental import pallas as pl
from jax.experimental.pallas import tpu as pltpu


def _make_dropout_kernel(threshold_u32: int, scale: float):
    """mask = (bits < threshold), out = x * mask * scale."""

    def dropout_kernel(x_ref, bits_ref, out_ref, mask_ref):
        mask = (bits_ref[...] < jnp.uint32(threshold_u32)).astype(x_ref.dtype)
        mask_ref[...] = mask
        out_ref[...] = x_ref[...] * mask * jnp.asarray(scale, x_ref.dtype)

    return dropout_kernel


def _choose_layout(total: int, itemsize: int):
    # Lane-dense slab: pick the widest C (multiple of 128) dividing the flat size.
    for c in (8192, 4096, 2048, 1024, 512, 256, 128):
        if total % c == 0:
            lanes = c
            break
    else:
        raise ValueError("total number of elements must be a multiple of 128")
    rows = total // lanes
    # ~1 MiB per input block, rounded down to a multiple of 8 sublanes.
    tile_r = max(8, ((1 << 20) // (lanes * itemsize)) // 8 * 8)
    tile_r = min(tile_r, rows)  # if rows < tile_r the block spans the full axis
    return rows, lanes, tile_r


def my_dropout_forward(x, p: float = 0.05, seed: int = 0, training: bool = True):
    """Pallas implementation of MyDropout.forward.

    Returns (output, mask).  In eval mode (training=False) returns (x, None),
    exactly like the PyTorch module.
    """
    if p < 0 or p > 1:
        raise ValueError(
            "dropout probability has to be between 0 and 1, but got {}".format(p)
        )
    if not training:
        return x, None

    keep_prob = 1.0 - p
    scale = 1.0 / (1.0 - p)
    # Bernoulli(keep_prob) as a single integer threshold on raw uint32 bits.
    threshold = min(int(keep_prob * float(1 << 32)), (1 << 32) - 1)

    orig_shape = x.shape
    total = math.prod(orig_shape)
    rows, lanes, tile_r = _choose_layout(total, jnp.dtype(x.dtype).itemsize)
    x2 = x.reshape(rows, lanes)

    # Random bits for the whole tensor; each grid step reads its own tile, so
    # tiles draw independent bits by construction (no per-tile reseeding issue).
    bits = jax.random.bits(jax.random.PRNGKey(seed), (rows, lanes), dtype=jnp.uint32)

    kernel = _make_dropout_kernel(threshold, scale)
    block = pl.BlockSpec((tile_r, lanes), lambda i: (i, 0))

    out2, mask2 = pl.pallas_call(
        kernel,
        out_shape=(
            jax.ShapeDtypeStruct((rows, lanes), x.dtype),
            jax.ShapeDtypeStruct((rows, lanes), x.dtype),
        ),
        grid=(pl.cdiv(rows, tile_r),),
        in_specs=[block, block],
        out_specs=(block, block),
        compiler_params=pltpu.CompilerParams(
            dimension_semantics=("parallel",),
        ),
    )(x2, bits)

    return out2.reshape(orig_shape), mask2.reshape(orig_shape)


if __name__ == "__main__":
    p = 0.05
    key = jax.random.PRNGKey(0)
    # NCHW input, small shapes: batch=2, channels=4, spatial=16x16.
    x = jax.random.normal(key, (2, 4, 16, 16), dtype=jnp.float32)

    out, mask = my_dropout_forward(x, p=p, seed=0, training=True)
    out = jax.block_until_ready(out)
    mask = jax.block_until_ready(mask)

    # Sanity checks: mask is {0,1}, output == x * mask / (1 - p).
    assert bool(jnp.all((mask == 0.0) | (mask == 1.0)))
    expected = x * mask * (1.0 / (1.0 - p))
    assert bool(jnp.allclose(out, expected, atol=1e-6))
    # Keep rate should be roughly 1 - p (loose bound for a small tensor).
    keep_frac = float(jnp.mean(mask))
    assert 0.85 <= keep_frac <= 1.0

    # Eval mode passes input through unchanged.
    out_eval, _ = my_dropout_forward(x, p=p, training=False)
    assert bool(jnp.allclose(jax.block_until_ready(out_eval), x))

    print("KERNEL_OK")
</pallas_src>

<mosaic_0001>
module attributes {stable_mosaic.version = 11 : i64} {
  func.func @dropout_kernel(%arg0: i32, %arg1: memref<1x2048xf32, #tpu.memory_space<vmem>>, %arg2: memref<1x2048xi32, #tpu.memory_space<vmem>>, %arg3: memref<1x2048xf32, #tpu.memory_space<vmem>>, %arg4: memref<1x2048xf32, #tpu.memory_space<vmem>>) attributes {dimension_semantics = [#tpu.dimension_semantics<parallel>], iteration_bounds = array<i64: 1>, scalar_prefetch = 0 : i64, scratch_operands = 0 : i64, tpu.core_type = #tpu.core_type<tc>, window_params = [{transform_indices = @transform_0, window_bounds = array<i64: 1, 2048>}, {transform_indices = @transform_1, window_bounds = array<i64: 1, 2048>}, {transform_indices = @transform_2, window_bounds = array<i64: 1, 2048>}, {transform_indices = @transform_3, window_bounds = array<i64: 1, 2048>}]} {
    %c0 = arith.constant 0 : index
    %c0_0 = arith.constant 0 : index
    %0 = vector.load %arg2[%c0, %c0_0] : memref<1x2048xi32, #tpu.memory_space<vmem>>, vector<1x2048xi32>
    %c-214748365_i32 = arith.constant -214748365 : i32
    %1 = vector.broadcast %c-214748365_i32 : i32 to vector<1x2048xi32>
    %2 = arith.cmpi ult, %0, %1 : vector<1x2048xi32>
    %3 = arith.extui %2 : vector<1x2048xi1> to vector<1x2048xi32>
    %4 = arith.sitofp %3 : vector<1x2048xi32> to vector<1x2048xf32>
    %c0_1 = arith.constant 0 : index
    %c0_2 = arith.constant 0 : index
    %5 = vector.load %arg4[%c0_1, %c0_2] : memref<1x2048xf32, #tpu.memory_space<vmem>>, vector<1x2048xf32>
    tpu.vector_store %arg4[%c0_1, %c0_2], %4 {strides = array<i32>} : memref<1x2048xf32, #tpu.memory_space<vmem>>, vector<1x2048xf32>,
    %c0_3 = arith.constant 0 : index
    %c0_4 = arith.constant 0 : index
    %6 = vector.load %arg1[%c0_3, %c0_4] : memref<1x2048xf32, #tpu.memory_space<vmem>>, vector<1x2048xf32>
    %7 = arith.mulf %6, %4 : vector<1x2048xf32>
    %cst = arith.constant 1.05263162 : f32
    %8 = vector.broadcast %cst : f32 to vector<1x2048xf32>
    %9 = arith.mulf %7, %8 : vector<1x2048xf32>
    %c0_5 = arith.constant 0 : index
    %c0_6 = arith.constant 0 : index
    %10 = vector.load %arg3[%c0_5, %c0_6] : memref<1x2048xf32, #tpu.memory_space<vmem>>, vector<1x2048xf32>
    tpu.vector_store %arg3[%c0_5, %c0_6], %9 {strides = array<i32>} : memref<1x2048xf32, #tpu.memory_space<vmem>>, vector<1x2048xf32>,
    return
  }
  func.func @transform_0(%arg0: i32) -> (i32, i32) {
    %c0_i32 = arith.constant 0 : i32
    %c0_i32_0 = arith.constant 0 : i32
    return %arg0, %c0_i32 : i32, i32
  }
  func.func @transform_1(%arg0: i32) -> (i32, i32) {
    %c0_i32 = arith.constant 0 : i32
    %c0_i32_0 = arith.constant 0 : i32
    return %arg0, %c0_i32 : i32, i32
  }
  func.func @transform_2(%arg0: i32) -> (i32, i32) {
    %c0_i32 = arith.constant 0 : i32
    %c0_i32_0 = arith.constant 0 : i32
    return %arg0, %c0_i32 : i32, i32
  }
  func.func @transform_3(%arg0: i32) -> (i32, i32) {
    %c0_i32 = arith.constant 0 : i32
    %c0_i32_0 = arith.constant 0 : i32
    return %arg0, %c0_i32 : i32, i32
  }
}

</mosaic_0001>

<llo_original>
// kernel: tpu_custom_call.1
$region0: #{tpu_custom_call.1}
  #allocation0 [shape = 'u32[]', space=smem, size = 0x4, offset = 0x4, fixed_abs, tag = 'smem constant byte address 0x4 - core index']
  #allocation1 [shape = 'u32[144,128]{1,0:T(1,128)}', space=vmem, size = 0x12000, scoped, tag = 'internal scratch']
  %s0 = inlined_call_operand.hbm [shape: f32[1,2048], index: 0, kind: input, shape index: {}]
  %s1 = inlined_call_operand.hbm [shape: u32[1,2048], index: 1, kind: input, shape index: {}]
  %s2 = inlined_call_operand.hbm [shape: f32[1,2048], index: 2, kind: output, shape index: {0}]
  %s3 = inlined_call_operand.hbm [shape: f32[1,2048], index: 3, kind: output, shape index: {1}]
  %4 = xla_tuple %s2, %s3
  %s5 = sld [smem:[#allocation0]]
  $region34: #{tpu_custom_call.1} parent=0
    _
  %s7 = ssub.s32 1, %s5
  %s8 = scalar_select 0, %s7, %s5
  $region1: #{tpu_custom_call.1} parent=0
    #allocation2 [shape = 'u8[8192]{0}', space=vmem, size = 0x2000, scoped, tag = 'input window, operand 0, single buffered']
    #allocation3 [shape = 's32[1]{0}', space=sflag, size = 0x4, scoped, tag = 'scoped memory for tpu_custom_call.1']
    #allocation4 [shape = 's32[1]{0}', space=sflag, size = 0x4, scoped, tag = 'scoped memory for tpu_custom_call.1']
    #allocation5 [shape = 'u8[8192]{0}', space=vmem, size = 0x2000, scoped, tag = 'input window, operand 1, single buffered']
    #allocation6 [shape = 's32[1]{0}', space=sflag, size = 0x4, scoped, tag = 'scoped memory for tpu_custom_call.1']
    #allocation7 [shape = 'u8[8192]{0}', space=vmem, size = 0x2000, scoped, tag = 'output window, operand 0, single buffered']
    #allocation8 [shape = 'u8[8192]{0}', space=vmem, size = 0x2000, scoped, tag = 'output window, operand 1, single buffered']
    #allocation9 [shape = 's32[1]{0}', space=sflag, size = 0x4, scoped, tag = 'scoped memory for tpu_custom_call.1']
    %9 = vsyncpa [#allocation3], 0
    %10 = vsyncpa [#allocation6], 0
    %11 = vsyncpa [#allocation4], 0
    %12 = vsyncpa [#allocation9], 0
    // Predicated region
    $region2: #{tpu_custom_call.1} parent=1 // pred_check
      _
    $region3: #{tpu_custom_call.1} parent=1 // pred_check_branch
      %14 = sbr.rel (0) target = $region5
    $region4: #{tpu_custom_call.1} parent=1 // pred_region
      %s16 = ssub.s32 256, 256
      %17 = vsyncadd [#allocation3], %s16
      %s19 = sshll.u32 [#allocation2], 4
      %s20 = int_to_ptr.vmem [resolvable:$true] %s19
      %22 = dma.hbm_to_vmem [thread:$0]  %s0, 256, %s20, [#allocation3]
    $region5: #{tpu_custom_call.1} parent=1 // pred_fallthru
      _
    // Predicated region
    $region6: #{tpu_custom_call.1} parent=1 // pred_check
      _
    $region7: #{tpu_custom_call.1} parent=1 // pred_check_branch
      %24 = sbr.rel (0) target = $region9
    $region8: #{tpu_custom_call.1} parent=1 // pred_region
      %s26 = ssub.s32 256, 256
      %27 = vsyncadd [#allocation6], %s26
      %s29 = sshll.u32 [#allocation5], 4
      %s30 = int_to_ptr.vmem [resolvable:$true] %s29
      %32 = dma.hbm_to_vmem [thread:$0]  %s1, 256, %s30, [#allocation6]
    $region9: #{tpu_custom_call.1} parent=1 // pred_fallthru
      _
    // Predicated region
    $region10: #{tpu_custom_call.1} parent=1 // pred_check
      _
    $region11: #{tpu_custom_call.1} parent=1 // pred_check_branch
      %34 = sbr.rel (0) target = $region13
    $region12: #{tpu_custom_call.1} parent=1 // pred_region
      %35 = dma.done [#allocation3], 256
    $region13: #{tpu_custom_call.1} parent=1 // pred_fallthru
      _
    // Predicated region
    $region14: #{tpu_custom_call.1} parent=1 // pred_check
      _
    $region15: #{tpu_custom_call.1} parent=1 // pred_check_branch
      %37 = sbr.rel (0) target = $region17
    $region16: #{tpu_custom_call.1} parent=1 // pred_region
      %38 = dma.done [#allocation6], 256
    $region17: #{tpu_custom_call.1} parent=1 // pred_fallthru
      _
    %v39 = vld [vmem:[#allocation5] sm:$0xff]
    %v40 = vld [vmem:[#allocation5 + $0x8] sm:$0xff]
    %vm41 = vcmp.lt.u32.totalorder %v39, 4080218931
    %vm42 = vcmp.lt.u32.totalorder %v40, 4080218931
    %v43 = vsel %vm41, 1, 0
    %v44 = vsel %vm42, 1, 0
    %v45 = vcvt.s32.f32 %v43
    %v46 = vcvt.s32.f32 %v44
    %47 = vst [vmem:[#allocation8] sm:$0xff] %v45
    %48 = vst [vmem:[#allocation8 + $0x8] sm:$0xff] %v46
    %v49 = vld [vmem:[#allocation2] sm:$0xff]
    %v50 = vld [vmem:[#allocation2 + $0x8] sm:$0xff]
    %v51 = vmul.f32 %v49, %v45
    %v52 = vmul.f32 %v50, %v46
    %v53 = vmul.f32 %v51, 1.0526316
    %v54 = vmul.f32 %v52, 1.0526316
    %55 = vst [vmem:[#allocation7] sm:$0xff] %v53
    %56 = vst [vmem:[#allocation7 + $0x8] sm:$0xff] %v54
    // Predicated region
    $region18: #{tpu_custom_call.1} parent=1 // pred_check
      _
    $region19: #{tpu_custom_call.1} parent=1 // pred_check_branch
      %58 = sbr.rel (0) target = $region21
    $region20: #{tpu_custom_call.1} parent=1 // pred_region
      %s60 = ssub.s32 256, 256
      %61 = vsyncadd [#allocation4], %s60
      %s63 = sshll.u32 [#allocation7], 4
      %s64 = int_to_ptr.vmem [resolvable:$true] %s63
      %66 = dma.vmem_to_hbm [thread:$0]  %s64, 256, %s2, [#allocation4]
    $region21: #{tpu_custom_call.1} parent=1 // pred_fallthru
      _
    // Predicated region
    $region22: #{tpu_custom_call.1} parent=1 // pred_check
      _
    $region23: #{tpu_custom_call.1} parent=1 // pred_check_branch
      %68 = sbr.rel (0) target = $region25
    $region24: #{tpu_custom_call.1} parent=1 // pred_region
      %s70 = ssub.s32 256, 256
      %71 = vsyncadd [#allocation9], %s70
      %s73 = sshll.u32 [#allocation8], 4
      %s74 = int_to_ptr.vmem [resolvable:$true] %s73
      %76 = dma.vmem_to_hbm [thread:$0]  %s74, 256, %s3, [#allocation9]
    $region25: #{tpu_custom_call.1} parent=1 // pred_fallthru
      _
    // Predicated region
    $region26: #{tpu_custom_call.1} parent=1 // pred_check
      _
    $region27: #{tpu_custom_call.1} parent=1 // pred_check_branch
      %78 = sbr.rel (0) target = $region29
    $region28: #{tpu_custom_call.1} parent=1 // pred_region
      %79 = dma.done [#allocation4], 256
    $region29: #{tpu_custom_call.1} parent=1 // pred_fallthru
      _
    // Predicated region
    $region30: #{tpu_custom_call.1} parent=1 // pred_check
      _
    $region31: #{tpu_custom_call.1} parent=1 // pred_check_branch
      %81 = sbr.rel (0) target = $region33
    $region32: #{tpu_custom_call.1} parent=1 // pred_region
      %82 = dma.done [#allocation9], 256
    $region33: #{tpu_custom_call.1} parent=1 // pred_fallthru
      _
    %83 = vsyncpa [#allocation3], 1
    %84 = vsyncpa [#allocation6], 1
    %85 = vsyncpa [#allocation4], 1
    %86 = vsyncpa [#allocation9], 1

</llo_original>
